<compile_context>
chip_gen: v5e
topology: v5e:2x2
jax: 0.10.0
libtpu: 0.0.40
codegen_flags: <defaults>
</compile_context>

<pallas_src>
import jax
import jax.numpy as jnp
import numpy as np
from jax.experimental import pallas as pl
from jax.experimental.pallas import tpu as pltpu


# ----------------------------- parameter setup ------------------------------

def glorot_init(key, input_dim, output_dim):
    """Deterministic equivalent of the torch glorot_init (uniform in +-range)."""
    init_range = np.sqrt(6.0 / (input_dim + output_dim))
    u = jax.random.uniform(key, (input_dim, output_dim), dtype=jnp.float32)
    return u * 2.0 * init_range - init_range


def ortho_norm(weight):
    """W_ortho = W @ inv(chol(W^T W + 1e-4 I))^T via triangular solve (no inv)."""
    wtw = weight.T @ weight + 1e-4 * jnp.eye(weight.shape[1], dtype=weight.dtype)
    L = jnp.linalg.cholesky(wtw)
    # W @ L^{-T} == (L^{-1} W^T)^T == solve_triangular(L, W^T, lower=True)^T
    return jax.scipy.linalg.solve_triangular(L, weight.T, lower=True).T


# ------------------------------ Pallas kernel --------------------------------

def _mvgcn_fused_kernel(x_ref, flt_ref, w1_ref, w2_ref, o_ref):
    """Fused 2-layer GCN over ALL views in a single invocation.

    x_ref  : (V*N, D0) bf16  -- views stacked along sublanes (feeds MXU V*N rows)
    flt_ref: (V, N, N) bf16  -- per-view normalized graph filter
    w1_ref : (D0, D1)  bf16  -- shared, pre-orthonormalized
    w2_ref : (D1, D2)  bf16  -- shared, pre-orthonormalized (no lane padding)
    o_ref  : (V*N, D2) f32
    """
    V, N, _ = flt_ref.shape
    flt = flt_ref[...]

    # ---- layer 1: hidden = tanh(flt @ (x @ W1)) ----
    # Shared-weight matmul batched over views: one (V*N, D0) x (D0, D1) MXU op.
    xw1 = jnp.dot(x_ref[...], w1_ref[...],
                  preferred_element_type=jnp.float32)                  # (V*N, D1) f32
    xw1_v = xw1.reshape(V, N, -1).astype(jnp.bfloat16)
    hidden = jnp.tanh(
        jnp.einsum('vij,vjd->vid', flt, xw1_v,
                   preferred_element_type=jnp.float32))                # (V, N, D1) f32

    # ---- layer 2 (reassociated): out = tanh((flt @ hidden) @ W2) ----
    # flt matmul runs at K = D1 (16), not a lane-padded K = 128.
    fh = jnp.einsum('vij,vjd->vid', flt, hidden.astype(jnp.bfloat16),
                    preferred_element_type=jnp.float32)                # (V, N, D1) f32
    y = jnp.dot(fh.reshape(V * N, -1).astype(jnp.bfloat16), w2_ref[...],
                preferred_element_type=jnp.float32)                    # (V*N, D2) f32
    # tanh only on the D2-narrow result; store D2-wide (no pad + slice pass).
    o_ref[...] = jnp.tanh(y).astype(o_ref.dtype)


def mvgcn_forward(x, flt, w1_bf16, w2_bf16):
    """Fused 2-layer GCN over a stack of views.

    x:   (V, N, D0)  node features per view
    flt: (V, N, N)   normalized graph filter per view
    returns (V, N, D2) float32
    """
    V, N, D0 = x.shape
    D1 = w1_bf16.shape[1]
    D2 = w2_bf16.shape[1]

    # Stack views along sublanes (contiguous reshape: free, metadata only) and
    # cast MXU inputs to bf16 (halves HBM->VMEM DMA bytes; f32 accumulation).
    x2d = x.reshape(V * N, D0).astype(jnp.bfloat16)
    flt_b = flt.astype(jnp.bfloat16)

    out2d = pl.pallas_call(
        _mvgcn_fused_kernel,
        out_shape=jax.ShapeDtypeStruct((V * N, D2), jnp.float32),
        grid=(1,),  # single invocation: per-view grid steps cost more than the math here
        in_specs=[
            pl.BlockSpec((V * N, D0), lambda i: (0, 0)),      # features, all views
            pl.BlockSpec((V, N, N), lambda i: (0, 0, 0)),     # filters, all views
            pl.BlockSpec((D0, D1), lambda i: (0, 0)),         # W1 (shared)
            pl.BlockSpec((D1, D2), lambda i: (0, 0)),         # W2 (shared)
        ],
        out_specs=pl.BlockSpec((V * N, D2), lambda i: (0, 0)),
        compiler_params=pltpu.CompilerParams(
            dimension_semantics=("arbitrary",)),
    )(x2d, flt_b, w1_bf16, w2_bf16)

    # TODO(synk): add node-axis tiling + explicit vmem_limit_bytes before
    # scaling N (flt is O(N^2); v7x has 64 MiB VMEM vs 128 MiB on v5e/v6e).
    return out2d.reshape(V, N, D2)


# -------------------------------- MvGCN model --------------------------------

class MvGCNPallas:
    def __init__(self, hidden_dims, num_views, dropout, key):
        self.hidden_dims = hidden_dims
        self.num_views = num_views
        self.dropout = dropout
        k1, k2 = jax.random.split(key)
        self.w1 = glorot_init(k1, hidden_dims[0], hidden_dims[1])
        self.w2 = glorot_init(k2, hidden_dims[1], hidden_dims[2])
        # Static at inference: orthonormalize + bf16-cast once, off the hot path.
        self.w1_o = ortho_norm(self.w1)
        self.w2_o = ortho_norm(self.w2)
        self.w1_o_bf16 = self.w1_o.astype(jnp.bfloat16)
        self.w2_o_bf16 = self.w2_o.astype(jnp.bfloat16)

    def __call__(self, x, flt):
        """x: (N, D0) or (V, N, D0); flt: (N, N) or (V, N, N)."""
        single = (x.ndim == 2)
        if single:
            x = x[None]
            flt = flt[None]
        out = mvgcn_forward(x, flt, self.w1_o_bf16, self.w2_o_bf16)
        # TODO(synk): F.dropout is identity at inference; training-mode random
        # dropout (pltpu.prng_*) intentionally not applied.
        return out[0] if single else out


# ----------------------------------- main ------------------------------------

if __name__ == "__main__":
    key = jax.random.PRNGKey(0)
    k_params, k_x, k_adj = jax.random.split(key, 3)

    N = 64                       # number of graph nodes
    hidden_dims = [32, 16, 8]    # [input_dim, hidden_dim, output_dim]
    num_views = 2
    dropout = 0.5

    # Per-view node features and normalized graph filters (dense spmm stand-in).
    xs = jax.random.normal(k_x, (num_views, N, hidden_dims[0]), dtype=jnp.float32)
    adjs = jax.random.uniform(k_adj, (num_views, N, N), dtype=jnp.float32)
    adjs = (adjs + jnp.swapaxes(adjs, -1, -2)) * 0.5 + jnp.eye(N, dtype=jnp.float32)[None]
    deg_inv_sqrt = 1.0 / jnp.sqrt(adjs.sum(axis=-1))
    flts = deg_inv_sqrt[..., :, None] * adjs * deg_inv_sqrt[..., None, :]

    model = MvGCNPallas(hidden_dims, num_views, dropout, k_params)

    # Batched (multi-view) call: single fused kernel invocation for all views.
    out = model(xs, flts)
    jax.block_until_ready(out)

    # Single-view call (matches the original torch forward signature).
    out0 = model(xs[0], flts[0])
    jax.block_until_ready(out0)

    # Reference in plain JAX f32 (same math as the torch module).
    hidden_ref = jnp.tanh(flts @ (xs @ model.w1_o))
    ref = jnp.tanh(flts @ (hidden_ref @ model.w2_o))

    assert out.shape == (num_views, N, hidden_dims[2])
    assert out0.shape == (N, hidden_dims[2])
    # bf16 MXU inputs (f32 accumulation) -> relaxed tolerance vs. the f32 reference.
    np.testing.assert_allclose(np.asarray(out), np.asarray(ref),
                               rtol=2e-2, atol=2e-2)
    np.testing.assert_allclose(np.asarray(out0), np.asarray(ref[0]),
                               rtol=2e-2, atol=2e-2)
    print("KERNEL_OK")
</pallas_src>

<mosaic_0001>
module attributes {stable_mosaic.version = 11 : i64} {
  func.func @_mvgcn_fused_kernel(%arg0: i32, %arg1: memref<128x32xbf16, #tpu.memory_space<vmem>>, %arg2: memref<2x64x64xbf16, #tpu.memory_space<vmem>>, %arg3: memref<32x16xbf16, #tpu.memory_space<vmem>>, %arg4: memref<16x8xbf16, #tpu.memory_space<vmem>>, %arg5: memref<128x8xf32, #tpu.memory_space<vmem>>) attributes {dimension_semantics = [#tpu.dimension_semantics<arbitrary>], iteration_bounds = array<i64: 1>, scalar_prefetch = 0 : i64, scratch_operands = 0 : i64, tpu.core_type = #tpu.core_type<tc>, window_params = [{pipeline_mode = #tpu.pipeline_mode<synchronous>, transform_indices = @transform_0, window_bounds = array<i64: 128, 32>}, {pipeline_mode = #tpu.pipeline_mode<synchronous>, transform_indices = @transform_1, window_bounds = array<i64: 2, 64, 64>}, {pipeline_mode = #tpu.pipeline_mode<synchronous>, transform_indices = @transform_2, window_bounds = array<i64: 32, 16>}, {pipeline_mode = #tpu.pipeline_mode<synchronous>, transform_indices = @transform_3, window_bounds = array<i64: 16, 8>}, {pipeline_mode = #tpu.pipeline_mode<synchronous>, transform_indices = @transform_4, window_bounds = array<i64: 128, 8>}]} {
    %c0 = arith.constant 0 : index
    %c0_0 = arith.constant 0 : index
    %c0_1 = arith.constant 0 : index
    %0 = vector.load %arg2[%c0, %c0_0, %c0_1] : memref<2x64x64xbf16, #tpu.memory_space<vmem>>, vector<2x64x64xbf16>
    %c0_2 = arith.constant 0 : index
    %c0_3 = arith.constant 0 : index
    %1 = vector.load %arg1[%c0_2, %c0_3] : memref<128x32xbf16, #tpu.memory_space<vmem>>, vector<128x32xbf16>
    %c0_4 = arith.constant 0 : index
    %c0_5 = arith.constant 0 : index
    %2 = vector.load %arg3[%c0_4, %c0_5] : memref<32x16xbf16, #tpu.memory_space<vmem>>, vector<32x16xbf16>
    %cst = arith.constant dense<0.000000e+00> : vector<128x16xf32>
    %3 = tpu.matmul %1, %2, %cst {dimension_numbers = #tpu.dot_dimension_numbers<[1], [0], [0], [1], [0, 0, 1, 1], [], []>} : vector<128x32xbf16>, vector<32x16xbf16>, vector<128x16xf32> -> vector<128x16xf32>
    %4 = vector.shape_cast %3 : vector<128x16xf32> to vector<2x64x16xf32>
    %5 = arith.truncf %4 : vector<2x64x16xf32> to vector<2x64x16xbf16>
    "tpu.trace_start"() <{level = 10 : i32, message = "vij,vjd->vid"}> : () -> ()
    %cst_6 = arith.constant dense<0.000000e+00> : vector<2x64x16xf32>
    %6 = tpu.matmul %0, %5, %cst_6 {dimension_numbers = #tpu.dot_dimension_numbers<[2], [1], [1], [2], [0, 0, 0, 1, 1, 2], [0], [0]>} : vector<2x64x64xbf16>, vector<2x64x16xbf16>, vector<2x64x16xf32> -> vector<2x64x16xf32>
    "tpu.trace_stop"() : () -> ()
    %7 = math.tanh %6 : vector<2x64x16xf32>
    %8 = arith.truncf %7 : vector<2x64x16xf32> to vector<2x64x16xbf16>
    "tpu.trace_start"() <{level = 10 : i32, message = "vij,vjd->vid"}> : () -> ()
    %cst_7 = arith.constant dense<0.000000e+00> : vector<2x64x16xf32>
    %9 = tpu.matmul %0, %8, %cst_7 {dimension_numbers = #tpu.dot_dimension_numbers<[2], [1], [1], [2], [0, 0, 0, 1, 1, 2], [0], [0]>} : vector<2x64x64xbf16>, vector<2x64x16xbf16>, vector<2x64x16xf32> -> vector<2x64x16xf32>
    "tpu.trace_stop"() : () -> ()
    %10 = vector.shape_cast %9 : vector<2x64x16xf32> to vector<128x16xf32>
    %11 = arith.truncf %10 : vector<128x16xf32> to vector<128x16xbf16>
    %c0_8 = arith.constant 0 : index
    %c0_9 = arith.constant 0 : index
    %12 = vector.load %arg4[%c0_8, %c0_9] : memref<16x8xbf16, #tpu.memory_space<vmem>>, vector<16x8xbf16>
    %cst_10 = arith.constant dense<0.000000e+00> : vector<128x8xf32>
    %13 = tpu.matmul %11, %12, %cst_10 {dimension_numbers = #tpu.dot_dimension_numbers<[1], [0], [0], [1], [0, 0, 1, 1], [], []>} : vector<128x16xbf16>, vector<16x8xbf16>, vector<128x8xf32> -> vector<128x8xf32>
    %14 = math.tanh %13 : vector<128x8xf32>
    %c0_11 = arith.constant 0 : index
    %c0_12 = arith.constant 0 : index
    %15 = vector.load %arg5[%c0_11, %c0_12] : memref<128x8xf32, #tpu.memory_space<vmem>>, vector<128x8xf32>
    tpu.vector_store %arg5[%c0_11, %c0_12], %14 {strides = array<i32>} : memref<128x8xf32, #tpu.memory_space<vmem>>, vector<128x8xf32>,
    return
  }
  func.func @transform_0(%arg0: i32) -> (i32, i32) {
    %c0_i32 = arith.constant 0 : i32
    %c0_i32_0 = arith.constant 0 : i32
    %c0_i32_1 = arith.constant 0 : i32
    return %c0_i32, %c0_i32_0 : i32, i32
  }
  func.func @transform_1(%arg0: i32) -> (i32, i32, i32) {
    %c0_i32 = arith.constant 0 : i32
    %c0_i32_0 = arith.constant 0 : i32
    %c0_i32_1 = arith.constant 0 : i32
    %c0_i32_2 = arith.constant 0 : i32
    return %c0_i32, %c0_i32_0, %c0_i32_1 : i32, i32, i32
  }
  func.func @transform_2(%arg0: i32) -> (i32, i32) {
    %c0_i32 = arith.constant 0 : i32
    %c0_i32_0 = arith.constant 0 : i32
    %c0_i32_1 = arith.constant 0 : i32
    return %c0_i32, %c0_i32_0 : i32, i32
  }
  func.func @transform_3(%arg0: i32) -> (i32, i32) {
    %c0_i32 = arith.constant 0 : i32
    %c0_i32_0 = arith.constant 0 : i32
    %c0_i32_1 = arith.constant 0 : i32
    return %c0_i32, %c0_i32_0 : i32, i32
  }
  func.func @transform_4(%arg0: i32) -> (i32, i32) {
    %c0_i32 = arith.constant 0 : i32
    %c0_i32_0 = arith.constant 0 : i32
    %c0_i32_1 = arith.constant 0 : i32
    return %c0_i32, %c0_i32_0 : i32, i32
  }
}

</mosaic_0001>

<llo_original>
// kernel: tpu_custom_call.1
$region0: #{tpu_custom_call.1}
  #allocation0 [shape = 'u32[]', space=smem, size = 0x4, offset = 0x4, fixed_abs, tag = 'smem constant byte address 0x4 - core index']
  #allocation1 [shape = 'u32[72,128]{1,0:T(1,128)}', space=vmem, size = 0x9000, scoped, tag = 'internal scratch']
  %s0 = inlined_call_operand.vmem [shape: bf16[128,32], index: 0, kind: input, shape index: {}]
  %s1 = inlined_call_operand.vmem [shape: bf16[2,64,64], index: 1, kind: input, shape index: {}]
  %s2 = inlined_call_operand.vmem [shape: bf16[32,16], index: 2, kind: input, shape index: {}]
  %s3 = inlined_call_operand.vmem [shape: bf16[16,8], index: 3, kind: input, shape index: {}]
  %s4 = inlined_call_operand.vmem [shape: f32[128,8], index: 4, kind: output, shape index: {}]
  %s5 = sld [smem:[#allocation0]]
  $region26: #{tpu_custom_call.1} parent=0
    _
  %s7 = ssub.s32 1, %s5
  %s8 = scalar_select 0, %s7, %s5
  // Predicated region
  $region2: #{tpu_custom_call.1} parent=0 // pred_check
    _
  $region3: #{tpu_custom_call.1} parent=0 // pred_check_branch
    %10 = sbr.rel (0) target = $region5
  $region4: #{tpu_custom_call.1} parent=0 // pred_region
    _
  $region5: #{tpu_custom_call.1} parent=0 // pred_fallthru
    _
  // Predicated region
  $region6: #{tpu_custom_call.1} parent=0 // pred_check
    _
  $region7: #{tpu_custom_call.1} parent=0 // pred_check_branch
    %12 = sbr.rel (0) target = $region9
  $region8: #{tpu_custom_call.1} parent=0 // pred_region
    _
  $region9: #{tpu_custom_call.1} parent=0 // pred_fallthru
    _
  // Predicated region
  $region10: #{tpu_custom_call.1} parent=0 // pred_check
    _
  $region11: #{tpu_custom_call.1} parent=0 // pred_check_branch
    %14 = sbr.rel (0) target = $region13
  $region12: #{tpu_custom_call.1} parent=0 // pred_region
    _
  $region13: #{tpu_custom_call.1} parent=0 // pred_fallthru
    _
  // Predicated region
  $region14: #{tpu_custom_call.1} parent=0 // pred_check
    _
  $region15: #{tpu_custom_call.1} parent=0 // pred_check_branch
    %16 = sbr.rel (0) target = $region17
  $region16: #{tpu_custom_call.1} parent=0 // pred_region
    _
  $region17: #{tpu_custom_call.1} parent=0 // pred_fallthru
    _
  %v18 = vld [vmem:[%s1] sm:$0xf]
  %v19 = vld [vmem:[%s1 + $0x4] sm:$0xf]
  %v20 = vld [vmem:[%s1 + $0x8] sm:$0xf]
  %v21 = vld [vmem:[%s1 + $0xc] sm:$0xf]
  %v22 = vld [vmem:[%s1 + $0x10] sm:$0xf]
  %v23 = vld [vmem:[%s1 + $0x14] sm:$0xf]
  %v24 = vld [vmem:[%s1 + $0x18] sm:$0xf]
  %v25 = vld [vmem:[%s1 + $0x1c] sm:$0xf]
  %v26 = vld [vmem:[%s1 + $0x20] sm:$0xf]
  %v27 = vld [vmem:[%s1 + $0x24] sm:$0xf]
  %v28 = vld [vmem:[%s1 + $0x28] sm:$0xf]
  %v29 = vld [vmem:[%s1 + $0x2c] sm:$0xf]
  %v30 = vld [vmem:[%s1 + $0x30] sm:$0xf]
  %v31 = vld [vmem:[%s1 + $0x34] sm:$0xf]
  %v32 = vld [vmem:[%s1 + $0x38] sm:$0xf]
  %v33 = vld [vmem:[%s1 + $0x3c] sm:$0xf]
  %v34 = vld [vmem:[%s0] sm:$0xf]
  %v35 = vld [vmem:[%s0 + $0x4] sm:$0xf]
  %v36 = vld [vmem:[%s0 + $0x8] sm:$0xf]
  %v37 = vld [vmem:[%s0 + $0xc] sm:$0xf]
  %v38 = vld [vmem:[%s0 + $0x10] sm:$0xf]
  %v39 = vld [vmem:[%s0 + $0x14] sm:$0xf]
  %v40 = vld [vmem:[%s0 + $0x18] sm:$0xf]
  %v41 = vld [vmem:[%s0 + $0x1c] sm:$0xf]
  %v42 = vld [vmem:[%s0 + $0x20] sm:$0xf]
  %v43 = vld [vmem:[%s0 + $0x24] sm:$0xf]
  %v44 = vld [vmem:[%s0 + $0x28] sm:$0xf]
  %v45 = vld [vmem:[%s0 + $0x2c] sm:$0xf]
  %v46 = vld [vmem:[%s0 + $0x30] sm:$0xf]
  %v47 = vld [vmem:[%s0 + $0x34] sm:$0xf]
  %v48 = vld [vmem:[%s0 + $0x38] sm:$0xf]
  %v49 = vld [vmem:[%s0 + $0x3c] sm:$0xf]
  %v50 = vld [vmem:[%s2] sm:$0xf]
  %v51 = vld [vmem:[%s2 + $0x4] sm:$0xf]
  %v52 = vld [vmem:[%s2 + $0x8] sm:$0xf]
  %v53 = vld [vmem:[%s2 + $0xc] sm:$0xf]
  %v70 = vunpack.c.l.b16 %v34
  %v71 = vunpack.c.l.b16 %v35
  %v72 = vunpack.c.l.b16 %v36
  %v73 = vunpack.c.l.b16 %v37
  %v74 = vunpack.c.l.b16 %v38
  %v75 = vunpack.c.l.b16 %v39
  %v76 = vunpack.c.l.b16 %v40
  %v77 = vunpack.c.l.b16 %v41
  %v78 = vunpack.c.l.b16 %v42
  %v79 = vunpack.c.l.b16 %v43
  %v80 = vunpack.c.l.b16 %v44
  %v81 = vunpack.c.l.b16 %v45
  %v82 = vunpack.c.l.b16 %v46
  %v83 = vunpack.c.l.b16 %v47
  %v84 = vunpack.c.l.b16 %v48
  %v85 = vunpack.c.l.b16 %v49
  %v86 = vpack.c.b16 %v71, %v70
  %v87 = vpack.c.b16 %v73, %v72
  %v88 = vpack.c.b16 %v75, %v74
  %v89 = vpack.c.b16 %v77, %v76
  %v90 = vpack.c.b16 %v79, %v78
  %v91 = vpack.c.b16 %v81, %v80
  %v92 = vpack.c.b16 %v83, %v82
  %v93 = vpack.c.b16 %v85, %v84
  %v98 = vunpack.c.l.b16 %v50
  %v99 = vunpack.c.l.b16 %v51
  %v100 = vunpack.c.l.b16 %v52
  %v101 = vunpack.c.l.b16 %v53
  %v102 = vpack.c.b16 %v99, %v98
  %v103 = vpack.c.b16 %v101, %v100
  %vm106 = vcmask 261120
  %v108 = vsel %vm106, %v86, 0
  %v111 = vsel %vm106, %v87, 0
  %v114 = vsel %vm106, %v88, 0
  %v117 = vsel %vm106, %v89, 0
  %v120 = vsel %vm106, %v90, 0
  %v123 = vsel %vm106, %v91, 0
  %v126 = vsel %vm106, %v92, 0
  %v129 = vsel %vm106, %v93, 0
  %131 = vmatpush.bf16.msra.mxu0 0
  %132 = vmatpush.bf16.msra.mxu0 0
  %133 = vmatpush.bf16.msra.mxu0 0
  %134 = vmatpush.bf16.msra.mxu0 0
  %135 = vmatpush.bf16.msra.mxu0 0
  %136 = vmatpush.bf16.msra.mxu0 0
  %137 = vmatpush.bf16.msra.mxu0 %v103
  %138 = vmatpush.bf16.msra.mxu0 %v102
  %139 = vmatmul.bf16.gmra.mxu0 %v108
  %v140 = vpop.f32.mrf.mxu0
  %v141 = vadd.f32 0.0, %v140
  %v142 = vpop.f32.mrf.mxu0
  %v143 = vadd.f32 0.0, %v142
  %144 = vmatmul.bf16.gmra.mxu0 %v111
  %v145 = vpop.f32.mrf.mxu0
  %v146 = vadd.f32 0.0, %v145
  %v147 = vpop.f32.mrf.mxu0
  %v148 = vadd.f32 0.0, %v147
  %149 = vmatmul.bf16.gmra.mxu0 %v114
  %v150 = vpop.f32.mrf.mxu0
  %v151 = vadd.f32 0.0, %v150
  %v152 = vpop.f32.mrf.mxu0
  %v153 = vadd.f32 0.0, %v152
  %154 = vmatmul.bf16.gmra.mxu0 %v117
  %v155 = vpop.f32.mrf.mxu0
  %v156 = vadd.f32 0.0, %v155
  %v157 = vpop.f32.mrf.mxu0
  %v158 = vadd.f32 0.0, %v157
  %159 = vmatmul.bf16.gmra.mxu0 %v120
  %v160 = vpop.f32.mrf.mxu0
  %v161 = vadd.f32 0.0, %v160
  %v162 = vpop.f32.mrf.mxu0
  %v163 = vadd.f32 0.0, %v162
  %164 = vmatmul.bf16.gmra.mxu0 %v123
  %v165 = vpop.f32.mrf.mxu0
  %v166 = vadd.f32 0.0, %v165
  %v167 = vpop.f32.mrf.mxu0
  %v168 = vadd.f32 0.0, %v167
  %169 = vmatmul.bf16.gmra.mxu0 %v126
  %v170 = vpop.f32.mrf.mxu0
  %v171 = vadd.f32 0.0, %v170
  %v172 = vpop.f32.mrf.mxu0
  %v173 = vadd.f32 0.0, %v172
  %174 = vmatmul.bf16.gmra.mxu0 %v129
  %v175 = vpop.f32.mrf.mxu0
  %v176 = vadd.f32 0.0, %v175
  %v177 = vpop.f32.mrf.mxu0
  %v178 = vadd.f32 0.0, %v177
  %179 = vdwg.mxu0
  %v180 = vpack.c.bf16 %v141, %v141
  %v181 = vpack.c.bf16 %v143, %v143
  %v182 = vpack.c.bf16 %v146, %v146
  %v183 = vpack.c.bf16 %v148, %v148
  %v184 = vpack.c.bf16 %v151, %v151
  %v185 = vpack.c.bf16 %v153, %v153
  %v186 = vpack.c.bf16 %v156, %v156
  %v187 = vpack.c.bf16 %v158, %v158
  %v188 = vpack.c.bf16 %v161, %v161
  %v189 = vpack.c.bf16 %v163, %v163
  %v190 = vpack.c.bf16 %v166, %v166
  %v191 = vpack.c.bf16 %v168, %v168
  %v192 = vpack.c.bf16 %v171, %v171
  %v193 = vpack.c.bf16 %v173, %v173
  %v194 = vpack.c.bf16 %v176, %v176
  %v195 = vpack.c.bf16 %v178, %v178
  %v204 = vunpack.c.l.b16 %v18
  %v205 = vunpack.c.l.b16 %v19
  %v206 = vunpack.c.l.b16 %v20
  %v207 = vunpack.c.l.b16 %v21
  %v208 = vunpack.c.l.b16 %v22
  %v209 = vunpack.c.l.b16 %v23
  %v210 = vunpack.c.l.b16 %v24
  %v211 = vunpack.c.l.b16 %v25
  %v212 = vpack.c.b16 %v205, %v204
  %v213 = vpack.c.b16 %v207, %v206
  %v214 = vpack.c.b16 %v209, %v208
  %v215 = vpack.c.b16 %v211, %v210
  %v224 = vunpack.c.l.b16 %v180
  %v225 = vunpack.c.l.b16 %v181
  %v226 = vunpack.c.l.b16 %v182
  %v227 = vunpack.c.l.b16 %v183
  %v228 = vunpack.c.l.b16 %v184
  %v229 = vunpack.c.l.b16 %v185
  %v230 = vunpack.c.l.b16 %v186
  %v231 = vunpack.c.l.b16 %v187
  %v232 = vpack.c.b16 %v225, %v224
  %v233 = vpack.c.b16 %v227, %v226
  %v234 = vpack.c.b16 %v229, %v228
  %v235 = vpack.c.b16 %v231, %v230
  %vm240 = vcmask 523264
  %v242 = vsel %vm240, %v212, 0
  %v245 = vsel %vm240, %v213, 0
  %v248 = vsel %vm240, %v214, 0
  %v251 = vsel %vm240, %v215, 0
  %253 = vmatpush.bf16.msra.mxu0 0
  %254 = vmatpush.bf16.msra.mxu0 0
  %255 = vmatpush.bf16.msra.mxu0 0
  %256 = vmatpush.bf16.msra.mxu0 0
  %257 = vmatpush.bf16.msra.mxu0 %v235
  %258 = vmatpush.bf16.msra.mxu0 %v234
  %259 = vmatpush.bf16.msra.mxu0 %v233
  %260 = vmatpush.bf16.msra.mxu0 %v232
  %261 = vmatmul.bf16.gmra.mxu0 %v242
  %v262 = vpop.f32.mrf.mxu0
  %v263 = vadd.f32 0.0, %v262
  %v264 = vpop.f32.mrf.mxu0
  %v265 = vadd.f32 0.0, %v264
  %266 = vmatmul.bf16.gmra.mxu0 %v245
  %v267 = vpop.f32.mrf.mxu0
  %v268 = vadd.f32 0.0, %v267
  %v269 = vpop.f32.mrf.mxu0
  %v270 = vadd.f32 0.0, %v269
  %271 = vmatmul.bf16.gmra.mxu0 %v248
  %v272 = vpop.f32.mrf.mxu0
  %v273 = vadd.f32 0.0, %v272
  %v274 = vpop.f32.mrf.mxu0
  %v275 = vadd.f32 0.0, %v274
  %276 = vmatmul.bf16.gmra.mxu0 %v251
  %v277 = vpop.f32.mrf.mxu0
  %v278 = vadd.f32 0.0, %v277
  %v279 = vpop.f32.mrf.mxu0
  %v280 = vadd.f32 0.0, %v279
  %281 = vdwg.mxu0
  %v290 = vunpack.c.l.b16 %v26
  %v291 = vunpack.c.l.b16 %v27
  %v292 = vunpack.c.l.b16 %v28
  %v293 = vunpack.c.l.b16 %v29
  %v294 = vunpack.c.l.b16 %v30
  %v295 = vunpack.c.l.b16 %v31
  %v296 = vunpack.c.l.b16 %v32
  %v297 = vunpack.c.l.b16 %v33
  %v298 = vpack.c.b16 %v291, %v290
  %v299 = vpack.c.b16 %v293, %v292
  %v300 = vpack.c.b16 %v295, %v294
  %v301 = vpack.c.b16 %v297, %v296
  %v310 = vunpack.c.l.b16 %v188
  %v311 = vunpack.c.l.b16 %v189
  %v312 = vunpack.c.l.b16 %v190
  %v313 = vunpack.c.l.b16 %v191
  %v314 = vunpack.c.l.b16 %v192
  %v315 = vunpack.c.l.b16 %v193
  %v316 = vunpack.c.l.b16 %v194
  %v317 = vunpack.c.l.b16 %v195
  %v318 = vpack.c.b16 %v311, %v310
  %v319 = vpack.c.b16 %v313, %v312
  %v320 = vpack.c.b16 %v315, %v314
  %v321 = vpack.c.b16 %v317, %v316
  %v327 = vsel %vm240, %v298, 0
  %v330 = vsel %vm240, %v299, 0
  %v333 = vsel %vm240, %v300, 0
  %v336 = vsel %vm240, %v301, 0
  %338 = vmatpush.bf16.msra.mxu0 0
  %339 = vmatpush.bf16.msra.mxu0 0
  %340 = vmatpush.bf16.msra.mxu0 0
  %341 = vmatpush.bf16.msra.mxu0 0
  %342 = vmatpush.bf16.msra.mxu0 %v321
  %343 = vmatpush.bf16.msra.mxu0 %v320
  %344 = vmatpush.bf16.msra.mxu0 %v319
  %345 = vmatpush.bf16.msra.mxu0 %v318
  %346 = vmatmul.bf16.gmra.mxu0 %v327
  %v347 = vpop.f32.mrf.mxu0
  %v348 = vadd.f32 0.0, %v347
  %v349 = vpop.f32.mrf.mxu0
  %v350 = vadd.f32 0.0, %v349
  %351 = vmatmul.bf16.gmra.mxu0 %v330
  %v352 = vpop.f32.mrf.mxu0
  %v353 = vadd.f32 0.0, %v352
  %v354 = vpop.f32.mrf.mxu0
  %v355 = vadd.f32 0.0, %v354
  %356 = vmatmul.bf16.gmra.mxu0 %v333
  %v357 = vpop.f32.mrf.mxu0
  %v358 = vadd.f32 0.0, %v357
  %v359 = vpop.f32.mrf.mxu0
  %v360 = vadd.f32 0.0, %v359
  %361 = vmatmul.bf16.gmra.mxu0 %v336
  %v362 = vpop.f32.mrf.mxu0
  %v363 = vadd.f32 0.0, %v362
  %v364 = vpop.f32.mrf.mxu0
  %v365 = vadd.f32 0.0, %v364
  %366 = vdwg.mxu0
  %v367 = vtanh.pop %v263
  %v368 = vtanh.pop %v265
  %v369 = vtanh.pop %v268
  %v370 = vtanh.pop %v270
  %v371 = vtanh.pop %v273
  %v372 = vtanh.pop %v275
  %v373 = vtanh.pop %v278
  %v374 = vtanh.pop %v280
  %v375 = vtanh.pop %v348
  %v376 = vtanh.pop %v350
  %v377 = vtanh.pop %v353
  %v378 = vtanh.pop %v355
  %v379 = vtanh.pop %v358
  %v380 = vtanh.pop %v360
  %v381 = vtanh.pop %v363
  %v382 = vtanh.pop %v365
  %v383 = vpack.c.bf16 %v367, %v367
  %v384 = vpack.c.bf16 %v368, %v368
  %v385 = vpack.c.bf16 %v369, %v369
  %v386 = vpack.c.bf16 %v370, %v370
  %v387 = vpack.c.bf16 %v371, %v371
  %v388 = vpack.c.bf16 %v372, %v372
  %v389 = vpack.c.bf16 %v373, %v373
  %v390 = vpack.c.bf16 %v374, %v374
  %v391 = vpack.c.bf16 %v375, %v375
  %v392 = vpack.c.bf16 %v376, %v376
  %v393 = vpack.c.bf16 %v377, %v377
  %v394 = vpack.c.bf16 %v378, %v378
  %v395 = vpack.c.bf16 %v379, %v379
  %v396 = vpack.c.bf16 %v380, %v380
  %v397 = vpack.c.bf16 %v381, %v381
  %v398 = vpack.c.bf16 %v382, %v382
  %v407 = vunpack.c.l.b16 %v383
  %v408 = vunpack.c.l.b16 %v384
  %v409 = vunpack.c.l.b16 %v385
  %v410 = vunpack.c.l.b16 %v386
  %v411 = vunpack.c.l.b16 %v387
  %v412 = vunpack.c.l.b16 %v388
  %v413 = vunpack.c.l.b16 %v389
  %v414 = vunpack.c.l.b16 %v390
  %v415 = vpack.c.b16 %v408, %v407
  %v416 = vpack.c.b16 %v410, %v409
  %v417 = vpack.c.b16 %v412, %v411
  %v418 = vpack.c.b16 %v414, %v413
  %423 = vmatpush.bf16.msra.mxu0 0
  %424 = vmatpush.bf16.msra.mxu0 0
  %425 = vmatpush.bf16.msra.mxu0 0
  %426 = vmatpush.bf16.msra.mxu0 0
  %427 = vmatpush.bf16.msra.mxu0 %v418
  %428 = vmatpush.bf16.msra.mxu0 %v417
  %429 = vmatpush.bf16.msra.mxu0 %v416
  %430 = vmatpush.bf16.msra.mxu0 %v415
  %431 = vmatmul.bf16.gmra.mxu0 %v242
  %v432 = vpop.f32.mrf.mxu0
  %v433 = vadd.f32 0.0, %v432
  %v434 = vpop.f32.mrf.mxu0
  %v435 = vadd.f32 0.0, %v434
  %436 = vmatmul.bf16.gmra.mxu0 %v245
  %v437 = vpop.f32.mrf.mxu0
  %v438 = vadd.f32 0.0, %v437
  %v439 = vpop.f32.mrf.mxu0
  %v440 = vadd.f32 0.0, %v439
  %441 = vmatmul.bf16.gmra.mxu0 %v248
  %v442 = vpop.f32.mrf.mxu0
  %v443 = vadd.f32 0.0, %v442
  %v444 = vpop.f32.mrf.mxu0
  %v445 = vadd.f32 0.0, %v444
  %446 = vmatmul.bf16.gmra.mxu0 %v251
  %v447 = vpop.f32.mrf.mxu0
  %v448 = vadd.f32 0.0, %v447
  %v449 = vpop.f32.mrf.mxu0
  %v450 = vadd.f32 0.0, %v449
  %451 = vdwg.mxu0
  %v460 = vunpack.c.l.b16 %v391
  %v461 = vunpack.c.l.b16 %v392
  %v462 = vunpack.c.l.b16 %v393
  %v463 = vunpack.c.l.b16 %v394
  %v464 = vunpack.c.l.b16 %v395
  %v465 = vunpack.c.l.b16 %v396
  %v466 = vunpack.c.l.b16 %v397
  %v467 = vunpack.c.l.b16 %v398
  %v468 = vpack.c.b16 %v461, %v460
  %v469 = vpack.c.b16 %v463, %v462
  %v470 = vpack.c.b16 %v465, %v464
  %v471 = vpack.c.b16 %v467, %v466
  %476 = vmatpush.bf16.msra.mxu0 0
  %477 = vmatpush.bf16.msra.mxu0 0
  %478 = vmatpush.bf16.msra.mxu0 0
  %479 = vmatpush.bf16.msra.mxu0 0
  %480 = vmatpush.bf16.msra.mxu0 %v471
  %481 = vmatpush.bf16.msra.mxu0 %v470
  %482 = vmatpush.bf16.msra.mxu0 %v469
  %483 = vmatpush.bf16.msra.mxu0 %v468
  %484 = vmatmul.bf16.gmra.mxu0 %v327
  %v485 = vpop.f32.mrf.mxu0
  %v486 = vadd.f32 0.0, %v485
  %v487 = vpop.f32.mrf.mxu0
  %v488 = vadd.f32 0.0, %v487
  %489 = vmatmul.bf16.gmra.mxu0 %v330
  %v490 = vpop.f32.mrf.mxu0
  %v491 = vadd.f32 0.0, %v490
  %v492 = vpop.f32.mrf.mxu0
  %v493 = vadd.f32 0.0, %v492
  %494 = vmatmul.bf16.gmra.mxu0 %v333
  %v495 = vpop.f32.mrf.mxu0
  %v496 = vadd.f32 0.0, %v495
  %v497 = vpop.f32.mrf.mxu0
  %v498 = vadd.f32 0.0, %v497
  %499 = vmatmul.bf16.gmra.mxu0 %v336
  %v500 = vpop.f32.mrf.mxu0
  %v501 = vadd.f32 0.0, %v500
  %v502 = vpop.f32.mrf.mxu0
  %v503 = vadd.f32 0.0, %v502
  %504 = vdwg.mxu0
  %v505 = vpack.c.bf16 %v435, %v433
  %v506 = vpack.c.bf16 %v440, %v438
  %v507 = vpack.c.bf16 %v445, %v443
  %v508 = vpack.c.bf16 %v450, %v448
  %v509 = vpack.c.bf16 %v488, %v486
  %v510 = vpack.c.bf16 %v493, %v491
  %v511 = vpack.c.bf16 %v498, %v496
  %v512 = vpack.c.bf16 %v503, %v501
  %v513 = vld [vmem:[%s3] sm:$0xf]
  %v514 = vld [vmem:[%s3 + $0x4] sm:$0xf]
  %v517 = vunpack.c.l.b16 %v513
  %v518 = vunpack.c.l.b16 %v514
  %v519 = vpack.c.b16 %v518, %v517
  %vm521 = vcmask 130048
  %v523 = vsel %vm521, %v505, 0
  %v526 = vsel %vm521, %v506, 0
  %v529 = vsel %vm521, %v507, 0
  %v532 = vsel %vm521, %v508, 0
  %v535 = vsel %vm521, %v509, 0
  %v538 = vsel %vm521, %v510, 0
  %v541 = vsel %vm521, %v511, 0
  %v544 = vsel %vm521, %v512, 0
  %546 = vmatpush.bf16.msra.mxu0 0
  %547 = vmatpush.bf16.msra.mxu0 0
  %548 = vmatpush.bf16.msra.mxu0 0
  %549 = vmatpush.bf16.msra.mxu0 0
  %550 = vmatpush.bf16.msra.mxu0 0
  %551 = vmatpush.bf16.msra.mxu0 0
  %552 = vmatpush.bf16.msra.mxu0 0
  %553 = vmatpush.bf16.msra.mxu0 %v519
  %554 = vmatmul.bf16.gmra.mxu0 %v523
  %v555 = vpop.f32.mrf.mxu0
  %v556 = vadd.f32 0.0, %v555
  %v557 = vpop.f32.mrf.mxu0
  %v558 = vadd.f32 0.0, %v557
  %559 = vmatmul.bf16.gmra.mxu0 %v526
  %v560 = vpop.f32.mrf.mxu0
  %v561 = vadd.f32 0.0, %v560
  %v562 = vpop.f32.mrf.mxu0
  %v563 = vadd.f32 0.0, %v562
  %564 = vmatmul.bf16.gmra.mxu0 %v529
  %v565 = vpop.f32.mrf.mxu0
  %v566 = vadd.f32 0.0, %v565
  %v567 = vpop.f32.mrf.mxu0
  %v568 = vadd.f32 0.0, %v567
  %569 = vmatmul.bf16.gmra.mxu0 %v532
  %v570 = vpop.f32.mrf.mxu0
  %v571 = vadd.f32 0.0, %v570
  %v572 = vpop.f32.mrf.mxu0
  %v573 = vadd.f32 0.0, %v572
  %574 = vmatmul.bf16.gmra.mxu0 %v535
  %v575 = vpop.f32.mrf.mxu0
  %v576 = vadd.f32 0.0, %v575
  %v577 = vpop.f32.mrf.mxu0
  %v578 = vadd.f32 0.0, %v577
  %579 = vmatmul.bf16.gmra.mxu0 %v538
  %v580 = vpop.f32.mrf.mxu0
  %v581 = vadd.f32 0.0, %v580
  %v582 = vpop.f32.mrf.mxu0
  %v583 = vadd.f32 0.0, %v582
  %584 = vmatmul.bf16.gmra.mxu0 %v541
  %v585 = vpop.f32.mrf.mxu0
  %v586 = vadd.f32 0.0, %v585
  %v587 = vpop.f32.mrf.mxu0
  %v588 = vadd.f32 0.0, %v587
  %589 = vmatmul.bf16.gmra.mxu0 %v544
  %v590 = vpop.f32.mrf.mxu0
  %v591 = vadd.f32 0.0, %v590
  %v592 = vpop.f32.mrf.mxu0
  %v593 = vadd.f32 0.0, %v592
  %594 = vdwg.mxu0
  %v595 = vtanh.pop %v556
  %v596 = vtanh.pop %v558
  %v597 = vtanh.pop %v561
  %v598 = vtanh.pop %v563
  %v599 = vtanh.pop %v566
  %v600 = vtanh.pop %v568
  %v601 = vtanh.pop %v571
  %v602 = vtanh.pop %v573
  %v603 = vtanh.pop %v576
  %v604 = vtanh.pop %v578
  %v605 = vtanh.pop %v581
  %v606 = vtanh.pop %v583
  %v607 = vtanh.pop %v586
  %v608 = vtanh.pop %v588
  %v609 = vtanh.pop %v591
  %v610 = vtanh.pop %v593
  %vm611 = vcmask 64512
  %612 = vst.msk [vmem:[%s4] sm:$0xff] %vm611, %v595
  %613 = vst.msk [vmem:[%s4 + $0x8] sm:$0xff] %vm611, %v596
  %614 = vst.msk [vmem:[%s4 + $0x10] sm:$0xff] %vm611, %v597
  %615 = vst.msk [vmem:[%s4 + $0x18] sm:$0xff] %vm611, %v598
  %616 = vst.msk [vmem:[%s4 + $0x20] sm:$0xff] %vm611, %v599
  %617 = vst.msk [vmem:[%s4 + $0x28] sm:$0xff] %vm611, %v600
  %618 = vst.msk [vmem:[%s4 + $0x30] sm:$0xff] %vm611, %v601
  %619 = vst.msk [vmem:[%s4 + $0x38] sm:$0xff] %vm611, %v602
  %620 = vst.msk [vmem:[%s4 + $0x40] sm:$0xff] %vm611, %v603
  %621 = vst.msk [vmem:[%s4 + $0x48] sm:$0xff] %vm611, %v604
  %622 = vst.msk [vmem:[%s4 + $0x50] sm:$0xff] %vm611, %v605
  %623 = vst.msk [vmem:[%s4 + $0x58] sm:$0xff] %vm611, %v606
  %624 = vst.msk [vmem:[%s4 + $0x60] sm:$0xff] %vm611, %v607
  %625 = vst.msk [vmem:[%s4 + $0x68] sm:$0xff] %vm611, %v608
  %626 = vst.msk [vmem:[%s4 + $0x70] sm:$0xff] %vm611, %v609
  %627 = vst.msk [vmem:[%s4 + $0x78] sm:$0xff] %vm611, %v610
  // Predicated region
  $region18: #{tpu_custom_call.1} parent=0 // pred_check
    _
  $region19: #{tpu_custom_call.1} parent=0 // pred_check_branch
    %629 = sbr.rel (0) target = $region21
  $region20: #{tpu_custom_call.1} parent=0 // pred_region
    _
  $region21: #{tpu_custom_call.1} parent=0 // pred_fallthru
    _
  // Predicated region
  $region22: #{tpu_custom_call.1} parent=0 // pred_check
    _
  $region23: #{tpu_custom_call.1} parent=0 // pred_check_branch
    %631 = sbr.rel (0) target = $region25
  $region24: #{tpu_custom_call.1} parent=0 // pred_region
    _
  $region25: #{tpu_custom_call.1} parent=0 // pred_fallthru
    _

</llo_original>
